<compile_context>
chip_gen: v5e
topology: v5e:2x2
jax: 0.10.0
libtpu: 0.0.40
codegen_flags: <defaults>
</compile_context>

<pallas_src>
import jax
import jax.numpy as jnp
from jax.experimental import pallas as pl
from jax.experimental.pallas import tpu as pltpu  # noqa: F401  (TPU-specific tuning hooks for larger shapes)


def identity_kernel(x_ref, o_ref):
    # Identity forward: copy the (aliased) input tile to the output tile.
    o_ref[...] = x_ref[...]


def pipe_module_forward(x):
    """PipeModule.forward (identity) — optimal path: no kernel launched.

    Perf review item #1: never launch a kernel for a passthrough; 100% of the
    previous kernel's cost was launch + DMA fixed overhead.
    """
    return x


def pipe_module_forward_pallas(x):
    """Identity forward kept as an explicit Pallas op boundary.

    Use only when a custom-call boundary is actually required (e.g. pipeline-
    parallel stage markers). The output aliases the input (perf review item #2),
    so no second HBM buffer is allocated. NOTE: the input buffer is donated to
    the output; callers must not reuse `x` after this call.
    """
    return pl.pallas_call(
        identity_kernel,
        out_shape=jax.ShapeDtypeStruct(x.shape, x.dtype),
        # Full-array block: block_shape equal to the array dims is always legal,
        # even when not (8,128)-aligned (50x60 here). At this size the
        # lane-sparse last dim (60 < 128) is noise; for real activation shapes,
        # tile lane-dense (last dim a multiple of 128, second-to-last >= 512 on
        # v5e/v6e, VMEM-sized for 64 MiB on v7x) or skip VMEM entirely with
        # memory_space=pl.ANY + a single pltpu.make_async_copy HBM->HBM.
        in_specs=[pl.BlockSpec(x.shape, lambda: (0, 0))],
        out_specs=pl.BlockSpec(x.shape, lambda: (0, 0)),
        grid=(),
        # Perf review item #2: alias output to input -> drop the extra HBM buffer.
        input_output_aliases={0: 0},
    )(x)


if __name__ == "__main__":
    key = jax.random.PRNGKey(0)
    # Matches the reference script: x = torch.rand(50, 60)
    x = jax.random.uniform(key, (50, 60), dtype=jnp.float32)

    # Independent buffer holding the same values: `x` itself may be donated to
    # the aliased Pallas output below, so never read `x` after that call.
    expected = x + 0.0

    # Optimal path (perf feedback #1): identity needs no kernel at all.
    y_direct = pipe_module_forward(x)
    assert y_direct is x  # true zero-copy passthrough

    # Pallas path (kept only to preserve an explicit op/stage boundary).
    y = pipe_module_forward_pallas(x)
    jax.block_until_ready(y)

    assert y.shape == expected.shape and y.dtype == expected.dtype
    assert bool(jnp.allclose(y, expected)), "identity kernel mismatch"
    print("KERNEL_OK")
</pallas_src>

<mosaic_0001>
module attributes {stable_mosaic.version = 11 : i64} {
  func.func @identity_kernel(%arg0: memref<50x60xf32, #tpu.memory_space<vmem>>, %arg1: memref<50x60xf32, #tpu.memory_space<vmem>>) attributes {dimension_semantics = [], scalar_prefetch = 0 : i64, scratch_operands = 0 : i64, tpu.core_type = #tpu.core_type<tc>} {
    %c0 = arith.constant 0 : index
    %c0_0 = arith.constant 0 : index
    %0 = vector.load %arg0[%c0, %c0_0] : memref<50x60xf32, #tpu.memory_space<vmem>>, vector<50x60xf32>
    %c0_1 = arith.constant 0 : index
    %c0_2 = arith.constant 0 : index
    %1 = vector.load %arg1[%c0_1, %c0_2] : memref<50x60xf32, #tpu.memory_space<vmem>>, vector<50x60xf32>
    tpu.vector_store %arg1[%c0_1, %c0_2], %0 {strides = array<i32>} : memref<50x60xf32, #tpu.memory_space<vmem>>, vector<50x60xf32>,
    return
  }
}

</mosaic_0001>

<llo_original>
// kernel: tpu_custom_call.1
$region0: #{tpu_custom_call.1}
  #allocation0 [shape = 'u32[]', space=smem, size = 0x4, offset = 0x4, fixed_abs, tag = 'smem constant byte address 0x4 - core index']
  #allocation1 [shape = 'u32[72,128]{1,0:T(1,128)}', space=vmem, size = 0x9000, scoped, tag = 'internal scratch']
  %s0 = inlined_call_operand.hbm [shape: f32[50,60], index: 0, kind: input, shape index: {}, may-alias: {0,1}]
  %s1 = inlined_call_operand.hbm [shape: f32[50,60], index: 1, kind: output, shape index: {}, may-alias: {0,1}]
  %s2 = sld [smem:[#allocation0]]
  $region18: #{tpu_custom_call.1} parent=0
    _
  %s4 = ssub.s32 1, %s2
  %s5 = scalar_select 0, %s4, %s2
  $region1: #{tpu_custom_call.1} parent=0
    #allocation2 [shape = 'u8[28672]{0}', space=vmem, size = 0x7000, scoped, tag = 'input window, operand 0, single buffered']
    #allocation3 [shape = 's32[1]{0}', space=sflag, size = 0x4, scoped, tag = 'scoped memory for tpu_custom_call.1']
    #allocation4 [shape = 's32[1]{0}', space=sflag, size = 0x4, scoped, tag = 'scoped memory for tpu_custom_call.1']
    #allocation5 [shape = 'u8[28672]{0}', space=vmem, size = 0x7000, scoped, tag = 'output window, operand 0, single buffered']
    %6 = vsyncpa [#allocation3], 0
    %7 = vsyncpa [#allocation4], 0
    // Predicated region
    $region2: #{tpu_custom_call.1} parent=1 // pred_check
      _
    $region3: #{tpu_custom_call.1} parent=1 // pred_check_branch
      %9 = sbr.rel (0) target = $region5
    $region4: #{tpu_custom_call.1} parent=1 // pred_region
      %11 = vsyncadd [#allocation3], 0
      %s12 = sshll.u32 %s0, 4
      %s13 = int_to_ptr.hbm [resolvable:$true] %s12
      %s14 = sshll.u32 [#allocation2], 4
      %s15 = int_to_ptr.vmem [resolvable:$true] %s14
      %20 = dma.hbm_to_vmem [thread:$0]  %s13, 896, %s15, [#allocation3], 128, 128, 8
    $region5: #{tpu_custom_call.1} parent=1 // pred_fallthru
      _
    // Predicated region
    $region6: #{tpu_custom_call.1} parent=1 // pred_check
      _
    $region7: #{tpu_custom_call.1} parent=1 // pred_check_branch
      %22 = sbr.rel (0) target = $region9
    $region8: #{tpu_custom_call.1} parent=1 // pred_region
      %24 = dma.done [#allocation3], 896
    $region9: #{tpu_custom_call.1} parent=1 // pred_fallthru
      _
    %v25 = vld [vmem:[#allocation2] sm:$0xff]
    %v26 = vld [vmem:[#allocation2 + $0x8] sm:$0xff]
    %v27 = vld [vmem:[#allocation2 + $0x10] sm:$0xff]
    %v28 = vld [vmem:[#allocation2 + $0x18] sm:$0xff]
    %v29 = vld [vmem:[#allocation2 + $0x20] sm:$0xff]
    %v30 = vld [vmem:[#allocation2 + $0x28] sm:$0xff]
    %v31 = vld [vmem:[#allocation2 + $0x30] sm:$0x3]
    %vm32 = vcmask 490496
    %33 = vst.msk [vmem:[#allocation5] sm:$0xff] %vm32, %v25
    %34 = vst.msk [vmem:[#allocation5 + $0x8] sm:$0xff] %vm32, %v26
    %35 = vst.msk [vmem:[#allocation5 + $0x10] sm:$0xff] %vm32, %v27
    %36 = vst.msk [vmem:[#allocation5 + $0x18] sm:$0xff] %vm32, %v28
    %37 = vst.msk [vmem:[#allocation5 + $0x20] sm:$0xff] %vm32, %v29
    %38 = vst.msk [vmem:[#allocation5 + $0x28] sm:$0xff] %vm32, %v30
    %vm39 = vcmask 484352
    %40 = vst.msk [vmem:[#allocation5 + $0x30] sm:$0x3] %vm39, %v31
    // Predicated region
    $region10: #{tpu_custom_call.1} parent=1 // pred_check
      _
    $region11: #{tpu_custom_call.1} parent=1 // pred_check_branch
      %42 = sbr.rel (0) target = $region13
    $region12: #{tpu_custom_call.1} parent=1 // pred_region
      %44 = vsyncadd [#allocation4], 0
      %s45 = sshll.u32 [#allocation5], 4
      %s46 = int_to_ptr.vmem [resolvable:$true] %s45
      %s47 = sshll.u32 %s1, 4
      %s48 = int_to_ptr.hbm [resolvable:$true] %s47
      %53 = dma.vmem_to_hbm [thread:$0]  %s46, 896, %s48, [#allocation4], 128, 128, 8
    $region13: #{tpu_custom_call.1} parent=1 // pred_fallthru
      _
    // Predicated region
    $region14: #{tpu_custom_call.1} parent=1 // pred_check
      _
    $region15: #{tpu_custom_call.1} parent=1 // pred_check_branch
      %55 = sbr.rel (0) target = $region17
    $region16: #{tpu_custom_call.1} parent=1 // pred_region
      %57 = dma.done [#allocation4], 896
    $region17: #{tpu_custom_call.1} parent=1 // pred_fallthru
      _
    %58 = vsyncpa [#allocation3], 1
    %59 = vsyncpa [#allocation4], 1

</llo_original>
